<compile_context>
chip_gen: v5e
topology: v5e:2x2
jax: 0.10.0
libtpu: 0.0.40
codegen_flags: <defaults>
</compile_context>

<pallas_src>
import functools

import jax
import jax.numpy as jnp
from jax import lax
from jax.experimental import pallas as pl
from jax.experimental.pallas import tpu as pltpu

INPUT_SIZE = 6
HIDDEN_SIZE = 220
OUTPUT_SIZE = 1

_K_AUG = 8     # features (6) + bias column (1) + zero pad (1); MXU K pads to 8 anyway
_CHUNK = 128   # lanes per inner-loop iteration -> (220, 128) activation ~ 28 vregs


def _sigmoid(z):
    # tanh form: a single EUP push per vreg instead of exp + reciprocal.
    return 0.5 * (jnp.tanh(0.5 * z) + 1.0)


def _make_kernel(tb, compute_dtype):
    n_chunks = tb // _CHUNK

    def kernel(x_ref, w1_ref, w2_ref, b2_ref, out_ref):
        # x_ref:  (tb, 8)  f32, rows = batch, cols = [x(6), 1.0, 0.0]
        # w1_ref: (220, 8) f32, cols = [W1 | b1 | 0]   (resident across grid steps)
        # w2_ref: (220, 1) f32                          (resident across grid steps)
        # b2_ref: (1, 1)   f32 scalar in SMEM
        # out_ref:(1, tb)  f32 lane-dense output (batch on lanes)
        @pl.loop(0, n_chunks)
        def _(c):
            off = pl.multiple_of(c * _CHUNK, _CHUNK)
            xc = x_ref[pl.ds(off, _CHUNK), :]                        # (128, 8)
            # Layer 1 on the MXU; contract the feature axis of both operands
            # (== [W1|b1] @ xc.T): (220, 8) x (128, 8)^T -> (220, 128).
            h = lax.dot_general(
                w1_ref[...], xc,
                dimension_numbers=(((1,), (1,)), ((), ())),
                preferred_element_type=jnp.float32,
            )
            h = _sigmoid(h.astype(compute_dtype))                    # EUP tanh
            # Layer 2 (220 -> 1): VPU multiply + sublane reduction (no N=1 MXU op).
            w2 = w2_ref[...].astype(compute_dtype)                   # (220, 1)
            o = jnp.sum(h * w2, axis=0, keepdims=True).astype(jnp.float32)
            o = o + b2_ref[0, 0]
            out_ref[:, pl.ds(off, _CHUNK)] = _sigmoid(o).astype(out_ref.dtype)

    return kernel


def _round_up(n, m):
    return ((n + m - 1) // m) * m


@functools.partial(jax.jit, static_argnames=("tb", "use_bf16"))
def action_conditioned_ff(x, w1, b1, w2, b2, *, tb=4096, use_bf16=False):
    """Forward pass.

    x:  (B, 6) float32
    w1: (220, 6), b1: (220,)   -- PyTorch nn.Linear layout (out_features, in_features)
    w2: (1, 220), b2: (1,)
    returns (B, 1) float32
    """
    B = x.shape[0]
    # Tile selection: multiple of 128 lanes; >= 2 grid steps for v7x megacore when
    # the batch allows it; B padded to a whole number of tiles.
    tb = max(_CHUNK, _round_up(int(tb), _CHUNK))
    B_pad = _round_up(max(B, 1), _CHUNK)
    if B_pad <= tb:
        if B_pad >= 2 * _CHUNK:
            tb = _round_up(B_pad // 2, _CHUNK)
            B_pad = _round_up(B_pad, tb)
        else:
            tb = B_pad
    else:
        B_pad = _round_up(B_pad, tb)
    grid = (B_pad // tb,)

    # Fold the layer-1 bias into the matmul via a ones column.  All padding /
    # augmentation fuses under jit -- no separate host-side relayout pass.
    xf = x.astype(jnp.float32)
    x_aug = jnp.zeros((B_pad, _K_AUG), jnp.float32)
    x_aug = x_aug.at[:B, :INPUT_SIZE].set(xf)
    x_aug = x_aug.at[:, INPUT_SIZE].set(1.0)

    w1_aug = jnp.zeros((HIDDEN_SIZE, _K_AUG), jnp.float32)
    w1_aug = w1_aug.at[:, :INPUT_SIZE].set(w1.astype(jnp.float32))
    w1_aug = w1_aug.at[:, INPUT_SIZE].set(b1.astype(jnp.float32))

    w2_col = w2.reshape(HIDDEN_SIZE, 1).astype(jnp.float32)
    b2_s = b2.reshape(1, 1).astype(jnp.float32)

    compute_dtype = jnp.bfloat16 if use_bf16 else jnp.float32
    kernel = _make_kernel(tb, compute_dtype)

    out_t = pl.pallas_call(
        kernel,
        out_shape=jax.ShapeDtypeStruct((OUTPUT_SIZE, B_pad), jnp.float32),
        grid=grid,
        in_specs=[
            pl.BlockSpec((tb, _K_AUG), lambda i: (i, 0)),              # x tile streams
            pl.BlockSpec((HIDDEN_SIZE, _K_AUG), lambda i: (0, 0)),     # [W1|b1] resident
            pl.BlockSpec((HIDDEN_SIZE, 1), lambda i: (0, 0)),          # w2 resident
            pl.BlockSpec(memory_space=pltpu.MemorySpace.SMEM),         # b2 scalar
        ],
        out_specs=pl.BlockSpec((OUTPUT_SIZE, tb), lambda i: (0, i)),   # lane-dense out
        compiler_params=pltpu.CompilerParams(
            dimension_semantics=("parallel",),
            vmem_limit_bytes=32 * 1024 * 1024,
        ),
    )(x_aug, w1_aug, w2_col, b2_s)

    # Back to PyTorch's (B, 1) shape (tiny slice + transpose, fused under jit).
    return out_t[:, :B].T


def init_params(key):
    """nn.Linear-style U(-1/sqrt(fan_in), 1/sqrt(fan_in)) init, PyTorch layouts."""
    k1, k2, k3, k4 = jax.random.split(key, 4)
    bound1 = 1.0 / (INPUT_SIZE ** 0.5)
    bound2 = 1.0 / (HIDDEN_SIZE ** 0.5)
    w1 = jax.random.uniform(k1, (HIDDEN_SIZE, INPUT_SIZE), jnp.float32, -bound1, bound1)
    b1 = jax.random.uniform(k2, (HIDDEN_SIZE,), jnp.float32, -bound1, bound1)
    w2 = jax.random.uniform(k3, (OUTPUT_SIZE, HIDDEN_SIZE), jnp.float32, -bound2, bound2)
    b2 = jax.random.uniform(k4, (OUTPUT_SIZE,), jnp.float32, -bound2, bound2)
    return w1, b1, w2, b2


def reference_forward(x, w1, b1, w2, b2):
    h = jax.nn.sigmoid(x @ w1.T + b1)
    return jax.nn.sigmoid(h @ w2.T + b2)


# TODO(synk): Action_Conditioned_FF.evaluate() is a host-side DataLoader eval loop,
# not part of the forward pass; it has no Pallas equivalent and is omitted.

if __name__ == "__main__":
    key = jax.random.PRNGKey(0)
    kx, kp = jax.random.split(key)
    w1, b1, w2, b2 = init_params(kp)

    # Small batch: single grid step, single inner chunk.
    x_small = jax.random.normal(kx, (8, INPUT_SIZE), jnp.float32)
    out_small = jax.block_until_ready(action_conditioned_ff(x_small, w1, b1, w2, b2))
    ref_small = reference_forward(x_small, w1, b1, w2, b2)
    assert out_small.shape == (8, OUTPUT_SIZE)
    assert jnp.allclose(out_small, ref_small, atol=1e-5, rtol=1e-5), float(
        jnp.max(jnp.abs(out_small - ref_small)))

    # Non-multiple-of-128 batch: exercises padding, >=2 grid steps, inner chunk loop.
    x_big = jax.random.normal(kx, (300, INPUT_SIZE), jnp.float32)
    out_big = jax.block_until_ready(action_conditioned_ff(x_big, w1, b1, w2, b2))
    ref_big = reference_forward(x_big, w1, b1, w2, b2)
    assert out_big.shape == (300, OUTPUT_SIZE)
    assert jnp.allclose(out_big, ref_big, atol=1e-5, rtol=1e-5), float(
        jnp.max(jnp.abs(out_big - ref_big)))

    print("KERNEL_OK")
</pallas_src>

<mosaic_0001>
module attributes {stable_mosaic.version = 11 : i64} {
  func.func @kernel(%arg0: i32, %arg1: memref<128x8xf32, #tpu.memory_space<vmem>>, %arg2: memref<220x8xf32, #tpu.memory_space<vmem>>, %arg3: memref<220x1xf32, #tpu.memory_space<vmem>>, %arg4: memref<1x1xf32, #tpu.memory_space<smem>>, %arg5: memref<1x128xf32, #tpu.memory_space<vmem>>) attributes {dimension_semantics = [#tpu.dimension_semantics<parallel>], iteration_bounds = array<i64: 1>, scalar_prefetch = 0 : i64, scratch_operands = 0 : i64, tpu.core_type = #tpu.core_type<tc>, window_params = [{transform_indices = @transform_0, window_bounds = array<i64: 128, 8>}, {pipeline_mode = #tpu.pipeline_mode<synchronous>, transform_indices = @transform_1, window_bounds = array<i64: 220, 8>}, {pipeline_mode = #tpu.pipeline_mode<synchronous>, transform_indices = @transform_2, window_bounds = array<i64: 220, 1>}, {transform_indices = @transform_3, window_bounds = array<i64: 1, 1>}, {transform_indices = @transform_4, window_bounds = array<i64: 1, 128>}]} {
    %c0_i32 = arith.constant 0 : i32
    %c1_i32 = arith.constant 1 : i32
    %0 = arith.muli %c0_i32, %c1_i32 : i32
    %c0_i32_0 = arith.constant 0 : i32
    %1 = arith.addi %c0_i32_0, %0 : i32
    %c128_i32 = arith.constant 128 : i32
    %2 = arith.muli %1, %c128_i32 : i32
    %3 = tpu.assume_multiple %2, 128 : i32
    %4 = arith.index_cast %3 : i32 to index
    %c0 = arith.constant 0 : index
    %5 = vector.load %arg1[%4, %c0] : memref<128x8xf32, #tpu.memory_space<vmem>>, vector<128x8xf32>
    %c0_1 = arith.constant 0 : index
    %c0_2 = arith.constant 0 : index
    %6 = vector.load %arg2[%c0_1, %c0_2] : memref<220x8xf32, #tpu.memory_space<vmem>>, vector<220x8xf32>
    %cst = arith.constant dense<0.000000e+00> : vector<220x128xf32>
    %7 = tpu.matmul %6, %5, %cst {dimension_numbers = #tpu.dot_dimension_numbers<[1], [1], [0], [0], [0, 0, 1, 0], [], []>} : vector<220x8xf32>, vector<128x8xf32>, vector<220x128xf32> -> vector<220x128xf32>
    %cst_3 = arith.constant 5.000000e-01 : f32
    %8 = vector.broadcast %cst_3 : f32 to vector<220x128xf32>
    %9 = arith.mulf %8, %7 : vector<220x128xf32>
    %10 = math.tanh %9 : vector<220x128xf32>
    %cst_4 = arith.constant 1.000000e+00 : f32
    %11 = vector.broadcast %cst_4 : f32 to vector<220x128xf32>
    %12 = arith.addf %10, %11 : vector<220x128xf32>
    %cst_5 = arith.constant 5.000000e-01 : f32
    %13 = vector.broadcast %cst_5 : f32 to vector<220x128xf32>
    %14 = arith.mulf %13, %12 : vector<220x128xf32>
    %c0_6 = arith.constant 0 : index
    %c0_7 = arith.constant 0 : index
    %15 = vector.load %arg3[%c0_6, %c0_7] : memref<220x1xf32, #tpu.memory_space<vmem>>, vector<220x1xf32>
    %16 = vector.broadcast %15 : vector<220x1xf32> to vector<220x128xf32>
    %17 = arith.mulf %14, %16 : vector<220x128xf32>
    %cst_8 = arith.constant dense<0.000000e+00> : vector<128xf32>
    %18 = vector.multi_reduction <add>, %17, %cst_8 [0] : vector<220x128xf32> to vector<128xf32>
    %19 = vector.shape_cast %18 : vector<128xf32> to vector<1x128xf32>
    %c0_9 = arith.constant 0 : index
    %c0_10 = arith.constant 0 : index
    %20 = memref.load %arg4[%c0_9, %c0_10] : memref<1x1xf32, #tpu.memory_space<smem>>
    %21 = vector.broadcast %20 : f32 to vector<1x128xf32>
    %22 = arith.addf %19, %21 : vector<1x128xf32>
    %cst_11 = arith.constant 5.000000e-01 : f32
    %23 = vector.broadcast %cst_11 : f32 to vector<1x128xf32>
    %24 = arith.mulf %23, %22 : vector<1x128xf32>
    %25 = math.tanh %24 : vector<1x128xf32>
    %cst_12 = arith.constant 1.000000e+00 : f32
    %26 = vector.broadcast %cst_12 : f32 to vector<1x128xf32>
    %27 = arith.addf %25, %26 : vector<1x128xf32>
    %cst_13 = arith.constant 5.000000e-01 : f32
    %28 = vector.broadcast %cst_13 : f32 to vector<1x128xf32>
    %29 = arith.mulf %28, %27 : vector<1x128xf32>
    %c0_14 = arith.constant 0 : index
    %30 = arith.index_cast %3 : i32 to index
    %31 = vector.load %arg5[%c0_14, %30] : memref<1x128xf32, #tpu.memory_space<vmem>>, vector<1x128xf32>
    tpu.vector_store %arg5[%c0_14, %30], %29 {strides = array<i32>} : memref<1x128xf32, #tpu.memory_space<vmem>>, vector<1x128xf32>,
    %c1_i32_15 = arith.constant 1 : i32
    return
  }
  func.func @transform_0(%arg0: i32) -> (i32, i32) {
    %c0_i32 = arith.constant 0 : i32
    %c0_i32_0 = arith.constant 0 : i32
    return %arg0, %c0_i32 : i32, i32
  }
  func.func @transform_1(%arg0: i32) -> (i32, i32) {
    %c0_i32 = arith.constant 0 : i32
    %c0_i32_0 = arith.constant 0 : i32
    %c0_i32_1 = arith.constant 0 : i32
    return %c0_i32, %c0_i32_0 : i32, i32
  }
  func.func @transform_2(%arg0: i32) -> (i32, i32) {
    %c0_i32 = arith.constant 0 : i32
    %c0_i32_0 = arith.constant 0 : i32
    %c0_i32_1 = arith.constant 0 : i32
    return %c0_i32, %c0_i32_0 : i32, i32
  }
  func.func @transform_3(%arg0: i32) -> (i32, i32) {
    %c0_i32 = arith.constant 0 : i32
    %c0_i32_0 = arith.constant 0 : i32
    %c0_i32_1 = arith.constant 0 : i32
    return %c0_i32, %c0_i32_0 : i32, i32
  }
  func.func @transform_4(%arg0: i32) -> (i32, i32) {
    %c0_i32 = arith.constant 0 : i32
    %c0_i32_0 = arith.constant 0 : i32
    return %c0_i32, %arg0 : i32, i32
  }
}

</mosaic_0001>

<llo_original>
// kernel: action_conditioned_ff.1
$region0: #{action_conditioned_ff.1}
  #allocation0 [shape = 'u32[]', space=smem, size = 0x4, offset = 0x4, fixed_abs, tag = 'smem constant byte address 0x4 - core index']
  #allocation1 [shape = 'u32[72,128]{1,0:T(1,128)}', space=vmem, size = 0x9000, scoped, tag = 'internal scratch']
  #allocation2 [shape = 'f32[1,1]{1,0:T(1,128)S(6)}', space=smem, size = 0x200, scoped, tag = 'scoped memory for action_conditioned_ff.1']
  %s0 = inlined_call_operand.vmem [shape: f32[128,8], index: 0, kind: input, shape index: {}]
  %s1 = inlined_call_operand.vmem [shape: f32[220,8], index: 1, kind: input, shape index: {}]
  %s2 = inlined_call_operand.vmem [shape: f32[220,1], index: 2, kind: input, shape index: {}]
  %s3 = inlined_call_operand.<no memory space> [shape: f32[1,1], index: 3, kind: input, shape index: {}]
  %s4 = inlined_call_operand.vmem [shape: f32[1,128], index: 4, kind: output, shape index: {}]
  %s5 = sld [smem:[#allocation0]]
  $region26: #{action_conditioned_ff.1} parent=0
    _
  %s7 = ssub.s32 1, %s5
  %s8 = scalar_select 0, %s7, %s5
  %9 = sst [smem:[#allocation2]] %s3
  // Predicated region
  $region2: #{action_conditioned_ff.1} parent=0 // pred_check
    _
  $region3: #{action_conditioned_ff.1} parent=0 // pred_check_branch
    %11 = sbr.rel (0) target = $region5
  $region4: #{action_conditioned_ff.1} parent=0 // pred_region
    _
  $region5: #{action_conditioned_ff.1} parent=0 // pred_fallthru
    _
  // Predicated region
  $region6: #{action_conditioned_ff.1} parent=0 // pred_check
    _
  $region7: #{action_conditioned_ff.1} parent=0 // pred_check_branch
    %13 = sbr.rel (0) target = $region9
  $region8: #{action_conditioned_ff.1} parent=0 // pred_region
    _
  $region9: #{action_conditioned_ff.1} parent=0 // pred_fallthru
    _
  // Predicated region
  $region10: #{action_conditioned_ff.1} parent=0 // pred_check
    _
  $region11: #{action_conditioned_ff.1} parent=0 // pred_check_branch
    %15 = sbr.rel (0) target = $region13
  $region12: #{action_conditioned_ff.1} parent=0 // pred_region
    _
  $region13: #{action_conditioned_ff.1} parent=0 // pred_fallthru
    _
  // Predicated region
  $region14: #{action_conditioned_ff.1} parent=0 // pred_check
    _
  $region15: #{action_conditioned_ff.1} parent=0 // pred_check_branch
    %17 = sbr.rel (0) target = $region17
  $region16: #{action_conditioned_ff.1} parent=0 // pred_region
    _
  $region17: #{action_conditioned_ff.1} parent=0 // pred_fallthru
    _
  %v18 = vld [vmem:[%s0] sm:$0xff]
  %v19 = vld [vmem:[%s0 + $0x8] sm:$0xff]
  %v20 = vld [vmem:[%s0 + $0x10] sm:$0xff]
  %v21 = vld [vmem:[%s0 + $0x18] sm:$0xff]
  %v22 = vld [vmem:[%s0 + $0x20] sm:$0xff]
  %v23 = vld [vmem:[%s0 + $0x28] sm:$0xff]
  %v24 = vld [vmem:[%s0 + $0x30] sm:$0xff]
  %v25 = vld [vmem:[%s0 + $0x38] sm:$0xff]
  %v26 = vld [vmem:[%s0 + $0x40] sm:$0xff]
  %v27 = vld [vmem:[%s0 + $0x48] sm:$0xff]
  %v28 = vld [vmem:[%s0 + $0x50] sm:$0xff]
  %v29 = vld [vmem:[%s0 + $0x58] sm:$0xff]
  %v30 = vld [vmem:[%s0 + $0x60] sm:$0xff]
  %v31 = vld [vmem:[%s0 + $0x68] sm:$0xff]
  %v32 = vld [vmem:[%s0 + $0x70] sm:$0xff]
  %v33 = vld [vmem:[%s0 + $0x78] sm:$0xff]
  %v34 = vld [vmem:[%s1] sm:$0xff]
  %v35 = vld [vmem:[%s1 + $0x8] sm:$0xff]
  %v36 = vld [vmem:[%s1 + $0x10] sm:$0xff]
  %v37 = vld [vmem:[%s1 + $0x18] sm:$0xff]
  %v38 = vld [vmem:[%s1 + $0x20] sm:$0xff]
  %v39 = vld [vmem:[%s1 + $0x28] sm:$0xff]
  %v40 = vld [vmem:[%s1 + $0x30] sm:$0xff]
  %v41 = vld [vmem:[%s1 + $0x38] sm:$0xff]
  %v42 = vld [vmem:[%s1 + $0x40] sm:$0xff]
  %v43 = vld [vmem:[%s1 + $0x48] sm:$0xff]
  %v44 = vld [vmem:[%s1 + $0x50] sm:$0xff]
  %v45 = vld [vmem:[%s1 + $0x58] sm:$0xff]
  %v46 = vld [vmem:[%s1 + $0x60] sm:$0xff]
  %v47 = vld [vmem:[%s1 + $0x68] sm:$0xff]
  %v48 = vld [vmem:[%s1 + $0x70] sm:$0xff]
  %v49 = vld [vmem:[%s1 + $0x78] sm:$0xff]
  %v50 = vld [vmem:[%s1 + $0x80] sm:$0xff]
  %v51 = vld [vmem:[%s1 + $0x88] sm:$0xff]
  %v52 = vld [vmem:[%s1 + $0x90] sm:$0xff]
  %v53 = vld [vmem:[%s1 + $0x98] sm:$0xff]
  %v54 = vld [vmem:[%s1 + $0xa0] sm:$0xff]
  %v55 = vld [vmem:[%s1 + $0xa8] sm:$0xff]
  %v56 = vld [vmem:[%s1 + $0xb0] sm:$0xff]
  %v57 = vld [vmem:[%s1 + $0xb8] sm:$0xff]
  %v58 = vld [vmem:[%s1 + $0xc0] sm:$0xff]
  %v59 = vld [vmem:[%s1 + $0xc8] sm:$0xff]
  %v60 = vld [vmem:[%s1 + $0xd0] sm:$0xff]
  %v61 = vld [vmem:[%s1 + $0xd8] sm:$0xf]
  %vm62 = vcmask 64512
  %v64 = vsel %vm62, %v34, 0
  %v67 = vsel %vm62, %v35, 0
  %v70 = vsel %vm62, %v36, 0
  %v73 = vsel %vm62, %v37, 0
  %v76 = vsel %vm62, %v38, 0
  %v79 = vsel %vm62, %v39, 0
  %v82 = vsel %vm62, %v40, 0
  %v85 = vsel %vm62, %v41, 0
  %v88 = vsel %vm62, %v42, 0
  %v91 = vsel %vm62, %v43, 0
  %v94 = vsel %vm62, %v44, 0
  %v97 = vsel %vm62, %v45, 0
  %v100 = vsel %vm62, %v46, 0
  %v103 = vsel %vm62, %v47, 0
  %v106 = vsel %vm62, %v48, 0
  %v109 = vsel %vm62, %v49, 0
  %v112 = vsel %vm62, %v50, 0
  %v115 = vsel %vm62, %v51, 0
  %v118 = vsel %vm62, %v52, 0
  %v121 = vsel %vm62, %v53, 0
  %v124 = vsel %vm62, %v54, 0
  %v127 = vsel %vm62, %v55, 0
  %v130 = vsel %vm62, %v56, 0
  %v133 = vsel %vm62, %v57, 0
  %v136 = vsel %vm62, %v58, 0
  %v139 = vsel %vm62, %v59, 0
  %v142 = vsel %vm62, %v60, 0
  %v145 = vsel %vm62, %v61, 0
  %v148 = vsel %vm62, %v18, 0
  %v151 = vsel %vm62, %v19, 0
  %v154 = vsel %vm62, %v20, 0
  %v157 = vsel %vm62, %v21, 0
  %v160 = vsel %vm62, %v22, 0
  %v163 = vsel %vm62, %v23, 0
  %v166 = vsel %vm62, %v24, 0
  %v169 = vsel %vm62, %v25, 0
  %v172 = vsel %vm62, %v26, 0
  %v175 = vsel %vm62, %v27, 0
  %v178 = vsel %vm62, %v28, 0
  %v181 = vsel %vm62, %v29, 0
  %v184 = vsel %vm62, %v30, 0
  %v187 = vsel %vm62, %v31, 0
  %v190 = vsel %vm62, %v32, 0
  %v193 = vsel %vm62, %v33, 0
  %195 = vmatpush.xpose.msra.mxu0 %v193
  %196 = vmatpush.xpose.msra.mxu0 %v190
  %197 = vmatpush.xpose.msra.mxu0 %v187
  %198 = vmatpush.xpose.msra.mxu0 %v184
  %199 = vmatpush.xpose.msra.mxu0 %v181
  %200 = vmatpush.xpose.msra.mxu0 %v178
  %201 = vmatpush.xpose.msra.mxu0 %v175
  %202 = vmatpush.xpose.msra.mxu0 %v172
  %203 = vmatpush.xpose.msra.mxu0 %v169
  %204 = vmatpush.xpose.msra.mxu0 %v166
  %205 = vmatpush.xpose.msra.mxu0 %v163
  %206 = vmatpush.xpose.msra.mxu0 %v160
  %207 = vmatpush.xpose.msra.mxu0 %v157
  %208 = vmatpush.xpose.msra.mxu0 %v154
  %209 = vmatpush.xpose.msra.mxu0 %v151
  %210 = vmatpush.xpose.msra.mxu0 %v148
  %211 = vmatmul.f32.gmra.mxu0 %v64
  %v212 = vpop.f32.mrf.mxu0
  %v213 = vadd.f32 0.0, %v212
  %214 = vmatmul.f32.gmra.mxu0 %v67
  %v215 = vpop.f32.mrf.mxu0
  %v216 = vadd.f32 0.0, %v215
  %217 = vmatmul.f32.gmra.mxu0 %v70
  %v218 = vpop.f32.mrf.mxu0
  %v219 = vadd.f32 0.0, %v218
  %220 = vmatmul.f32.gmra.mxu0 %v73
  %v221 = vpop.f32.mrf.mxu0
  %v222 = vadd.f32 0.0, %v221
  %223 = vmatmul.f32.gmra.mxu0 %v76
  %v224 = vpop.f32.mrf.mxu0
  %v225 = vadd.f32 0.0, %v224
  %226 = vmatmul.f32.gmra.mxu0 %v79
  %v227 = vpop.f32.mrf.mxu0
  %v228 = vadd.f32 0.0, %v227
  %229 = vmatmul.f32.gmra.mxu0 %v82
  %v230 = vpop.f32.mrf.mxu0
  %v231 = vadd.f32 0.0, %v230
  %232 = vmatmul.f32.gmra.mxu0 %v85
  %v233 = vpop.f32.mrf.mxu0
  %v234 = vadd.f32 0.0, %v233
  %235 = vmatmul.f32.gmra.mxu0 %v88
  %v236 = vpop.f32.mrf.mxu0
  %v237 = vadd.f32 0.0, %v236
  %238 = vmatmul.f32.gmra.mxu0 %v91
  %v239 = vpop.f32.mrf.mxu0
  %v240 = vadd.f32 0.0, %v239
  %241 = vmatmul.f32.gmra.mxu0 %v94
  %v242 = vpop.f32.mrf.mxu0
  %v243 = vadd.f32 0.0, %v242
  %244 = vmatmul.f32.gmra.mxu0 %v97
  %v245 = vpop.f32.mrf.mxu0
  %v246 = vadd.f32 0.0, %v245
  %247 = vmatmul.f32.gmra.mxu0 %v100
  %v248 = vpop.f32.mrf.mxu0
  %v249 = vadd.f32 0.0, %v248
  %250 = vmatmul.f32.gmra.mxu0 %v103
  %v251 = vpop.f32.mrf.mxu0
  %v252 = vadd.f32 0.0, %v251
  %253 = vmatmul.f32.gmra.mxu0 %v106
  %v254 = vpop.f32.mrf.mxu0
  %v255 = vadd.f32 0.0, %v254
  %256 = vmatmul.f32.gmra.mxu0 %v109
  %v257 = vpop.f32.mrf.mxu0
  %v258 = vadd.f32 0.0, %v257
  %259 = vmatmul.f32.gmra.mxu0 %v112
  %v260 = vpop.f32.mrf.mxu0
  %v261 = vadd.f32 0.0, %v260
  %262 = vmatmul.f32.gmra.mxu0 %v115
  %v263 = vpop.f32.mrf.mxu0
  %v264 = vadd.f32 0.0, %v263
  %265 = vmatmul.f32.gmra.mxu0 %v118
  %v266 = vpop.f32.mrf.mxu0
  %v267 = vadd.f32 0.0, %v266
  %268 = vmatmul.f32.gmra.mxu0 %v121
  %v269 = vpop.f32.mrf.mxu0
  %v270 = vadd.f32 0.0, %v269
  %271 = vmatmul.f32.gmra.mxu0 %v124
  %v272 = vpop.f32.mrf.mxu0
  %v273 = vadd.f32 0.0, %v272
  %274 = vmatmul.f32.gmra.mxu0 %v127
  %v275 = vpop.f32.mrf.mxu0
  %v276 = vadd.f32 0.0, %v275
  %277 = vmatmul.f32.gmra.mxu0 %v130
  %v278 = vpop.f32.mrf.mxu0
  %v279 = vadd.f32 0.0, %v278
  %280 = vmatmul.f32.gmra.mxu0 %v133
  %v281 = vpop.f32.mrf.mxu0
  %v282 = vadd.f32 0.0, %v281
  %283 = vmatmul.f32.gmra.mxu0 %v136
  %v284 = vpop.f32.mrf.mxu0
  %v285 = vadd.f32 0.0, %v284
  %286 = vmatmul.f32.gmra.mxu0 %v139
  %v287 = vpop.f32.mrf.mxu0
  %v288 = vadd.f32 0.0, %v287
  %289 = vmatmul.f32.gmra.mxu0 %v142
  %v290 = vpop.f32.mrf.mxu0
  %v291 = vadd.f32 0.0, %v290
  %292 = vmatmul.f32.gmra.mxu0 %v145
  %v293 = vpop.f32.mrf.mxu0
  %v294 = vadd.f32 0.0, %v293
  %295 = vdwg.mxu0
  %v296 = vmul.f32 %v213, 0.5
  %v297 = vmul.f32 %v216, 0.5
  %v298 = vmul.f32 %v219, 0.5
  %v299 = vmul.f32 %v222, 0.5
  %v300 = vmul.f32 %v225, 0.5
  %v301 = vmul.f32 %v228, 0.5
  %v302 = vmul.f32 %v231, 0.5
  %v303 = vmul.f32 %v234, 0.5
  %v304 = vmul.f32 %v237, 0.5
  %v305 = vmul.f32 %v240, 0.5
  %v306 = vmul.f32 %v243, 0.5
  %v307 = vmul.f32 %v246, 0.5
  %v308 = vmul.f32 %v249, 0.5
  %v309 = vmul.f32 %v252, 0.5
  %v310 = vmul.f32 %v255, 0.5
  %v311 = vmul.f32 %v258, 0.5
  %v312 = vmul.f32 %v261, 0.5
  %v313 = vmul.f32 %v264, 0.5
  %v314 = vmul.f32 %v267, 0.5
  %v315 = vmul.f32 %v270, 0.5
  %v316 = vmul.f32 %v273, 0.5
  %v317 = vmul.f32 %v276, 0.5
  %v318 = vmul.f32 %v279, 0.5
  %v319 = vmul.f32 %v282, 0.5
  %v320 = vmul.f32 %v285, 0.5
  %v321 = vmul.f32 %v288, 0.5
  %v322 = vmul.f32 %v291, 0.5
  %v323 = vmul.f32 %v294, 0.5
  %v324 = vtanh.pop %v296
  %v325 = vtanh.pop %v297
  %v326 = vtanh.pop %v298
  %v327 = vtanh.pop %v299
  %v328 = vtanh.pop %v300
  %v329 = vtanh.pop %v301
  %v330 = vtanh.pop %v302
  %v331 = vtanh.pop %v303
  %v332 = vtanh.pop %v304
  %v333 = vtanh.pop %v305
  %v334 = vtanh.pop %v306
  %v335 = vtanh.pop %v307
  %v336 = vtanh.pop %v308
  %v337 = vtanh.pop %v309
  %v338 = vtanh.pop %v310
  %v339 = vtanh.pop %v311
  %v340 = vtanh.pop %v312
  %v341 = vtanh.pop %v313
  %v342 = vtanh.pop %v314
  %v343 = vtanh.pop %v315
  %v344 = vtanh.pop %v316
  %v345 = vtanh.pop %v317
  %v346 = vtanh.pop %v318
  %v347 = vtanh.pop %v319
  %v348 = vtanh.pop %v320
  %v349 = vtanh.pop %v321
  %v350 = vtanh.pop %v322
  %v351 = vtanh.pop %v323
  %v352 = vadd.f32 %v324, 1.0
  %v353 = vadd.f32 %v325, 1.0
  %v354 = vadd.f32 %v326, 1.0
  %v355 = vadd.f32 %v327, 1.0
  %v356 = vadd.f32 %v328, 1.0
  %v357 = vadd.f32 %v329, 1.0
  %v358 = vadd.f32 %v330, 1.0
  %v359 = vadd.f32 %v331, 1.0
  %v360 = vadd.f32 %v332, 1.0
  %v361 = vadd.f32 %v333, 1.0
  %v362 = vadd.f32 %v334, 1.0
  %v363 = vadd.f32 %v335, 1.0
  %v364 = vadd.f32 %v336, 1.0
  %v365 = vadd.f32 %v337, 1.0
  %v366 = vadd.f32 %v338, 1.0
  %v367 = vadd.f32 %v339, 1.0
  %v368 = vadd.f32 %v340, 1.0
  %v369 = vadd.f32 %v341, 1.0
  %v370 = vadd.f32 %v342, 1.0
  %v371 = vadd.f32 %v343, 1.0
  %v372 = vadd.f32 %v344, 1.0
  %v373 = vadd.f32 %v345, 1.0
  %v374 = vadd.f32 %v346, 1.0
  %v375 = vadd.f32 %v347, 1.0
  %v376 = vadd.f32 %v348, 1.0
  %v377 = vadd.f32 %v349, 1.0
  %v378 = vadd.f32 %v350, 1.0
  %v379 = vadd.f32 %v351, 1.0
  %v380 = vmul.f32 %v352, 0.5
  %v381 = vmul.f32 %v353, 0.5
  %v382 = vmul.f32 %v354, 0.5
  %v383 = vmul.f32 %v355, 0.5
  %v384 = vmul.f32 %v356, 0.5
  %v385 = vmul.f32 %v357, 0.5
  %v386 = vmul.f32 %v358, 0.5
  %v387 = vmul.f32 %v359, 0.5
  %v388 = vmul.f32 %v360, 0.5
  %v389 = vmul.f32 %v361, 0.5
  %v390 = vmul.f32 %v362, 0.5
  %v391 = vmul.f32 %v363, 0.5
  %v392 = vmul.f32 %v364, 0.5
  %v393 = vmul.f32 %v365, 0.5
  %v394 = vmul.f32 %v366, 0.5
  %v395 = vmul.f32 %v367, 0.5
  %v396 = vmul.f32 %v368, 0.5
  %v397 = vmul.f32 %v369, 0.5
  %v398 = vmul.f32 %v370, 0.5
  %v399 = vmul.f32 %v371, 0.5
  %v400 = vmul.f32 %v372, 0.5
  %v401 = vmul.f32 %v373, 0.5
  %v402 = vmul.f32 %v374, 0.5
  %v403 = vmul.f32 %v375, 0.5
  %v404 = vmul.f32 %v376, 0.5
  %v405 = vmul.f32 %v377, 0.5
  %v406 = vmul.f32 %v378, 0.5
  %v407 = vmul.f32 %v379, 0.5
  %v408 = vld [vmem:[%s2] sm:$0xff]
  %v409 = vld [vmem:[%s2 + $0x8] sm:$0xff]
  %v410 = vld [vmem:[%s2 + $0x10] sm:$0xff]
  %v411 = vld [vmem:[%s2 + $0x18] sm:$0xff]
  %v412 = vld [vmem:[%s2 + $0x20] sm:$0xff]
  %v413 = vld [vmem:[%s2 + $0x28] sm:$0xff]
  %v414 = vld [vmem:[%s2 + $0x30] sm:$0xff]
  %v415 = vld [vmem:[%s2 + $0x38] sm:$0xff]
  %v416 = vld [vmem:[%s2 + $0x40] sm:$0xff]
  %v417 = vld [vmem:[%s2 + $0x48] sm:$0xff]
  %v418 = vld [vmem:[%s2 + $0x50] sm:$0xff]
  %v419 = vld [vmem:[%s2 + $0x58] sm:$0xff]
  %v420 = vld [vmem:[%s2 + $0x60] sm:$0xff]
  %v421 = vld [vmem:[%s2 + $0x68] sm:$0xff]
  %v422 = vld [vmem:[%s2 + $0x70] sm:$0xff]
  %v423 = vld [vmem:[%s2 + $0x78] sm:$0xff]
  %v424 = vld [vmem:[%s2 + $0x80] sm:$0xff]
  %v425 = vld [vmem:[%s2 + $0x88] sm:$0xff]
  %v426 = vld [vmem:[%s2 + $0x90] sm:$0xff]
  %v427 = vld [vmem:[%s2 + $0x98] sm:$0xff]
  %v428 = vld [vmem:[%s2 + $0xa0] sm:$0xff]
  %v429 = vld [vmem:[%s2 + $0xa8] sm:$0xff]
  %v430 = vld [vmem:[%s2 + $0xb0] sm:$0xff]
  %v431 = vld [vmem:[%s2 + $0xb8] sm:$0xff]
  %v432 = vld [vmem:[%s2 + $0xc0] sm:$0xff]
  %v433 = vld [vmem:[%s2 + $0xc8] sm:$0xff]
  %v434 = vld [vmem:[%s2 + $0xd0] sm:$0xff]
  %v435 = vld [vmem:[%s2 + $0xd8] sm:$0xf]
  %437 = vset.pattern.permute.xlu0 0
  %438 = vperm.xlu0 %437, %v408
  %v439 = vpop.permute.xlu0 %438
  %442 = vset.pattern.permute.xlu0 0
  %443 = vperm.xlu0 %442, %v409
  %v444 = vpop.permute.xlu0 %443
  %447 = vset.pattern.permute.xlu0 0
  %448 = vperm.xlu0 %447, %v410
  %v449 = vpop.permute.xlu0 %448
  %452 = vset.pattern.permute.xlu0 0
  %453 = vperm.xlu0 %452, %v411
  %v454 = vpop.permute.xlu0 %453
  %457 = vset.pattern.permute.xlu0 0
  %458 = vperm.xlu0 %457, %v412
  %v459 = vpop.permute.xlu0 %458
  %462 = vset.pattern.permute.xlu0 0
  %463 = vperm.xlu0 %462, %v413
  %v464 = vpop.permute.xlu0 %463
  %467 = vset.pattern.permute.xlu0 0
  %468 = vperm.xlu0 %467, %v414
  %v469 = vpop.permute.xlu0 %468
  %472 = vset.pattern.permute.xlu0 0
  %473 = vperm.xlu0 %472, %v415
  %v474 = vpop.permute.xlu0 %473
  %477 = vset.pattern.permute.xlu0 0
  %478 = vperm.xlu0 %477, %v416
  %v479 = vpop.permute.xlu0 %478
  %482 = vset.pattern.permute.xlu0 0
  %483 = vperm.xlu0 %482, %v417
  %v484 = vpop.permute.xlu0 %483
  %487 = vset.pattern.permute.xlu0 0
  %488 = vperm.xlu0 %487, %v418
  %v489 = vpop.permute.xlu0 %488
  %492 = vset.pattern.permute.xlu0 0
  %493 = vperm.xlu0 %492, %v419
  %v494 = vpop.permute.xlu0 %493
  %497 = vset.pattern.permute.xlu0 0
  %498 = vperm.xlu0 %497, %v420
  %v499 = vpop.permute.xlu0 %498
  %502 = vset.pattern.permute.xlu0 0
  %503 = vperm.xlu0 %502, %v421
  %v504 = vpop.permute.xlu0 %503
  %507 = vset.pattern.permute.xlu0 0
  %508 = vperm.xlu0 %507, %v422
  %v509 = vpop.permute.xlu0 %508
  %512 = vset.pattern.permute.xlu0 0
  %513 = vperm.xlu0 %512, %v423
  %v514 = vpop.permute.xlu0 %513
  %517 = vset.pattern.permute.xlu0 0
  %518 = vperm.xlu0 %517, %v424
  %v519 = vpop.permute.xlu0 %518
  %522 = vset.pattern.permute.xlu0 0
  %523 = vperm.xlu0 %522, %v425
  %v524 = vpop.permute.xlu0 %523
  %527 = vset.pattern.permute.xlu0 0
  %528 = vperm.xlu0 %527, %v426
  %v529 = vpop.permute.xlu0 %528
  %532 = vset.pattern.permute.xlu0 0
  %533 = vperm.xlu0 %532, %v427
  %v534 = vpop.permute.xlu0 %533
  %537 = vset.pattern.permute.xlu0 0
  %538 = vperm.xlu0 %537, %v428
  %v539 = vpop.permute.xlu0 %538
  %542 = vset.pattern.permute.xlu0 0
  %543 = vperm.xlu0 %542, %v429
  %v544 = vpop.permute.xlu0 %543
  %547 = vset.pattern.permute.xlu0 0
  %548 = vperm.xlu0 %547, %v430
  %v549 = vpop.permute.xlu0 %548
  %552 = vset.pattern.permute.xlu0 0
  %553 = vperm.xlu0 %552, %v431
  %v554 = vpop.permute.xlu0 %553
  %557 = vset.pattern.permute.xlu0 0
  %558 = vperm.xlu0 %557, %v432
  %v559 = vpop.permute.xlu0 %558
  %562 = vset.pattern.permute.xlu0 0
  %563 = vperm.xlu0 %562, %v433
  %v564 = vpop.permute.xlu0 %563
  %567 = vset.pattern.permute.xlu0 0
  %568 = vperm.xlu0 %567, %v434
  %v569 = vpop.permute.xlu0 %568
  %572 = vset.pattern.permute.xlu0 0
  %573 = vperm.xlu0 %572, %v435
  %v574 = vpop.permute.xlu0 %573
  %v576 = vmul.f32 %v380, %v439
  %v577 = vmul.f32 %v381, %v444
  %v578 = vmul.f32 %v382, %v449
  %v579 = vmul.f32 %v383, %v454
  %v580 = vmul.f32 %v384, %v459
  %v581 = vmul.f32 %v385, %v464
  %v582 = vmul.f32 %v386, %v469
  %v583 = vmul.f32 %v387, %v474
  %v584 = vmul.f32 %v388, %v479
  %v585 = vmul.f32 %v389, %v484
  %v586 = vmul.f32 %v390, %v489
  %v587 = vmul.f32 %v391, %v494
  %v588 = vmul.f32 %v392, %v499
  %v589 = vmul.f32 %v393, %v504
  %v590 = vmul.f32 %v394, %v509
  %v591 = vmul.f32 %v395, %v514
  %v592 = vmul.f32 %v396, %v519
  %v593 = vmul.f32 %v397, %v524
  %v594 = vmul.f32 %v398, %v529
  %v595 = vmul.f32 %v399, %v534
  %v596 = vmul.f32 %v400, %v539
  %v597 = vmul.f32 %v401, %v544
  %v598 = vmul.f32 %v402, %v549
  %v599 = vmul.f32 %v403, %v554
  %v600 = vmul.f32 %v404, %v559
  %v601 = vmul.f32 %v405, %v564
  %v602 = vmul.f32 %v406, %v569
  %v603 = vmul.f32 %v407, %v574
  %v604 = vadd.f32 %v576, %v577
  %v605 = vadd.f32 %v604, %v578
  %v606 = vadd.f32 %v605, %v579
  %v607 = vadd.f32 %v606, %v580
  %v608 = vadd.f32 %v607, %v581
  %v609 = vadd.f32 %v608, %v582
  %v610 = vadd.f32 %v609, %v583
  %v611 = vadd.f32 %v610, %v584
  %v612 = vadd.f32 %v611, %v585
  %v613 = vadd.f32 %v612, %v586
  %v614 = vadd.f32 %v613, %v587
  %v615 = vadd.f32 %v614, %v588
  %v616 = vadd.f32 %v615, %v589
  %v617 = vadd.f32 %v616, %v590
  %v618 = vadd.f32 %v617, %v591
  %v619 = vadd.f32 %v618, %v592
  %v620 = vadd.f32 %v619, %v593
  %v621 = vadd.f32 %v620, %v594
  %v622 = vadd.f32 %v621, %v595
  %v623 = vadd.f32 %v622, %v596
  %v624 = vadd.f32 %v623, %v597
  %v625 = vadd.f32 %v624, %v598
  %v626 = vadd.f32 %v625, %v599
  %v627 = vadd.f32 %v626, %v600
  %v628 = vadd.f32 %v627, %v601
  %v629 = vadd.f32 %v628, %v602
  %vm630 = vcmask 1043456
  %v631 = vsel %vm630, %v603, 0.0
  %v632 = vadd.f32 %v629, %v631
  %v633 = vrot.slane %v632, 4
  %v634 = vadd.f32 %v632, %v633
  %v635 = vrot.slane %v634, 2
  %v636 = vadd.f32 %v634, %v635
  %v637 = vrot.slane %v636, 1
  %v638 = vadd.f32 %v636, %v637
  %s639 = sld [smem:[#allocation2]]
  %v640 = vstv %s639
  %v641 = vadd.f32 %v638, %v640
  %v642 = vmul.f32 %v641, 0.5
  %v643 = vtanh.pop %v642
  %v644 = vadd.f32 %v643, 1.0
  %v645 = vmul.f32 %v644, 0.5
  %646 = vst [vmem:[%s4] sm:$0x1] %v645
  // Predicated region
  $region18: #{action_conditioned_ff.1} parent=0 // pred_check
    _
  $region19: #{action_conditioned_ff.1} parent=0 // pred_check_branch
    %648 = sbr.rel (0) target = $region21
  $region20: #{action_conditioned_ff.1} parent=0 // pred_region
    _
  $region21: #{action_conditioned_ff.1} parent=0 // pred_fallthru
    _
  // Predicated region
  $region22: #{action_conditioned_ff.1} parent=0 // pred_check
    _
  $region23: #{action_conditioned_ff.1} parent=0 // pred_check_branch
    %650 = sbr.rel (0) target = $region25
  $region24: #{action_conditioned_ff.1} parent=0 // pred_region
    _
  $region25: #{action_conditioned_ff.1} parent=0 // pred_fallthru
    _

</llo_original>
